<compile_context>
chip_gen: v7x
topology: tpu7x:2x2x1
jax: 0.10.0
libtpu: 0.0.40
codegen_flags: <defaults>
</compile_context>

<pallas_src>
import jax
import jax.numpy as jnp
import numpy as np
from jax.experimental import pallas as pl
from jax.experimental.pallas import tpu as pltpu

_LANE = 128            # pixels per lane-row of the de-interleaved output
_ILANE = 3 * _LANE     # interleaved NHWC elements per lane-row (128 px * 3 ch)


def _scales_biases(mean_value, std_value):
    """Per-output-channel scale (1/std) and bias (-mean/std) as Python floats."""
    if isinstance(mean_value, (int, float)):
        mean_value = [mean_value] * 3
    if isinstance(std_value, (int, float)):
        std_value = [std_value] * 3
    scales = [1.0 / float(std_value[c]) for c in range(3)]
    biases = [-float(mean_value[c]) / float(std_value[c]) for c in range(3)]
    return scales, biases


def _build_selector(bgr2rgb):
    """0/1 de-interleave matrix: column c*128+i picks input channel src(c) of
    pixel i out of the 384-wide interleaved lane row (BGR2RGB baked in)."""
    p = np.zeros((_ILANE, _ILANE), np.float32)
    for c in range(3):
        k = (2 - c) if bgr2rgb else c
        for i in range(_LANE):
            p[3 * i + k, c * _LANE + i] = 1.0
    return jnp.asarray(p, jnp.bfloat16)   # 0/1 entries are exact in bf16


def _pick_tr(R, N, target_rows, min_steps=4, min_rows=128):
    """Rows-of-128-pixels per block: largest divisor of R that is a multiple of
    8, capped at target_rows, shrunk (not below min_rows) until the grid has at
    least `min_steps` steps so both TensorCores get work on v7x."""
    if R % 8 != 0:
        return R                       # ragged row count: one full-extent block (legal, masked)
    divs = [d for d in range(8, R + 1, 8) if R % d == 0]
    cap = min(R, max(8, target_rows))
    tr = max(d for d in divs if d <= cap)
    if N * (R // tr) < min_steps:
        better = [d for d in divs
                  if d <= cap and d >= min_rows and N * (R // d) >= min_steps]
        if better:
            tr = max(better)
    return tr


def _make_kernel(scales, biases, split_f32):
    """Kernel with conv scale/bias baked in as scalar constants."""
    def kernel(x_ref, p_ref, o_ref):
        # x_ref: (1, TR, 384)  channel-interleaved NHWC rows of 128 pixels
        # p_ref: (384, 384)    bf16 0/1 de-interleave selector (resident in VMEM)
        # o_ref: (1, 3, TR, 128) NCHW output block
        xf = x_ref[0].astype(jnp.float32)            # on-chip upcast (u8/bf16 stay narrow in HBM)
        x_hi = xf.astype(jnp.bfloat16)
        terms = [x_hi]
        if split_f32:                                # exact f32 path: hi/lo bf16 split
            terms.append((xf - x_hi.astype(jnp.float32)).astype(jnp.bfloat16))
        for c in range(3):
            sel = p_ref[:, c * _LANE:(c + 1) * _LANE]                    # (384, 128)
            xc = jnp.dot(terms[0], sel, preferred_element_type=jnp.float32)
            for t in terms[1:]:
                xc = xc + jnp.dot(t, sel, preferred_element_type=jnp.float32)
            # The actual 1x1 conv: per-channel scale + shift on the VPU (f32).
            o_ref[0, c, :, :] = (xc * scales[c] + biases[c]).astype(o_ref.dtype)
    return kernel


def preprocess_conv_pallas(x_nhwc, mean_value, std_value, bgr2rgb=False,
                           out_dtype=None, target_pixels=1 << 18):
    """x_nhwc: [N, H, W, 3]. Returns NCHW [N, 3, H, W] after the frozen 1x1 conv."""
    N, H, W, C = x_nhwc.shape
    assert C == 3, "preprocess_conv_layer expects 3-channel NHWC input"
    if out_dtype is None:
        out_dtype = x_nhwc.dtype if jnp.issubdtype(x_nhwc.dtype, jnp.floating) else jnp.float32

    scales, biases = _scales_biases(mean_value, std_value)
    selector = _build_selector(bgr2rgb)
    d = x_nhwc.dtype
    # bf16 and 8-bit integer inputs are exact in a single bf16 MXU pass; wider
    # floats need the hi/lo split for full precision.
    split_f32 = not (d == jnp.bfloat16 or
                     (jnp.issubdtype(d, jnp.integer) and d.itemsize == 1))

    S = H * W
    if S % _LANE == 0:
        S_pad = S
        x2d = x_nhwc.reshape(N, S // _LANE, _ILANE)       # free row-major view
    else:
        # TODO(synk): awkward H*W (not a multiple of 128) falls back to an XLA
        # pad/slice round-trip (extra HBM passes); an in-kernel ragged tail would
        # need masked de-interleaved stores and is not worth the complexity here.
        S_pad = -(-S // (8 * _LANE)) * (8 * _LANE)
        x2d = jnp.pad(x_nhwc.reshape(N, S, 3), ((0, 0), (0, S_pad - S), (0, 0)))
        x2d = x2d.reshape(N, S_pad // _LANE, _ILANE)

    R = S_pad // _LANE
    TR = _pick_tr(R, N, max(8, target_pixels // _LANE))
    grid = (N, R // TR)

    out = pl.pallas_call(
        _make_kernel(scales, biases, split_f32),
        out_shape=jax.ShapeDtypeStruct((N, 3, R, _LANE), out_dtype),
        grid_spec=pltpu.PrefetchScalarGridSpec(
            num_scalar_prefetch=0,
            grid=grid,
            in_specs=[
                pl.BlockSpec((1, TR, _ILANE), lambda n, i: (n, i, 0)),
                pl.BlockSpec((_ILANE, _ILANE), lambda n, i: (0, 0)),   # selector stays resident
            ],
            out_specs=pl.BlockSpec((1, 3, TR, _LANE), lambda n, i: (n, 0, i, 0)),
        ),
        compiler_params=pltpu.CompilerParams(
            dimension_semantics=("parallel", "parallel"),
            vmem_limit_bytes=32 * 1024 * 1024,
        ),
    )(x2d, selector)

    out = out.reshape(N, 3, S_pad)
    if S_pad != S:
        out = out[:, :, :S]
    out_nchw = out.reshape(N, 3, H, W)
    # TODO(synk): `input_module` is an arbitrary user-supplied nn.Module; identity assumed.
    return out_nchw


def _reference(x_nhwc, mean_value, std_value, bgr2rgb):
    """Pure-JAX f32 reference: permute + per-channel (x - mean) / std (== the 1x1 conv)."""
    scales, biases = _scales_biases(mean_value, std_value)
    x = jnp.transpose(x_nhwc.astype(jnp.float32), (0, 3, 1, 2))   # NCHW
    chans = []
    for c in range(3):
        k = (2 - c) if bgr2rgb else c
        chans.append(x[:, k] * scales[c] + biases[c])
    return jnp.stack(chans, axis=1)


if __name__ == "__main__":
    key = jax.random.PRNGKey(0)
    mean_value = [123.675, 116.28, 103.53]
    std_value = [58.395, 57.12, 57.375]

    # Case 1: f32 NHWC, BGR2RGB=True, H*W a multiple of 128 (no pad path).
    N, H, W, C = 2, 32, 32, 3
    x = jax.random.uniform(key, (N, H, W, C), jnp.float32, 0.0, 255.0)
    out = jax.block_until_ready(
        jax.jit(lambda v: preprocess_conv_pallas(v, mean_value, std_value, bgr2rgb=True))(x))
    ref = _reference(x, mean_value, std_value, True)
    assert out.shape == (N, 3, H, W)
    assert jnp.allclose(out, ref, atol=1e-4, rtol=1e-4), float(jnp.max(jnp.abs(out - ref)))

    # Case 2: BGR2RGB=False.
    out2 = jax.block_until_ready(
        jax.jit(lambda v: preprocess_conv_pallas(v, mean_value, std_value, bgr2rgb=False))(x))
    ref2 = _reference(x, mean_value, std_value, False)
    assert jnp.allclose(out2, ref2, atol=1e-4, rtol=1e-4)

    # Case 3: uint8 input (native-dtype HBM reads, on-chip cast), scalar mean/std.
    xu8 = (jax.random.uniform(jax.random.PRNGKey(1), (N, H, W, C)) * 255.0).astype(jnp.uint8)
    out3 = jax.block_until_ready(
        jax.jit(lambda v: preprocess_conv_pallas(v, 128, 64, bgr2rgb=False))(xu8))
    ref3 = _reference(xu8, 128, 64, False)
    assert jnp.allclose(out3, ref3, atol=1e-4, rtol=1e-4)

    # Case 4: ragged spatial size (H*W % 128 != 0) -> pad/slice fallback path.
    xr = jax.random.uniform(jax.random.PRNGKey(2), (2, 13, 13, 3), jnp.float32, 0.0, 255.0)
    out4 = jax.block_until_ready(
        jax.jit(lambda v: preprocess_conv_pallas(v, mean_value, std_value, bgr2rgb=True))(xr))
    ref4 = _reference(xr, mean_value, std_value, True)
    assert out4.shape == (2, 3, 13, 13)
    assert jnp.allclose(out4, ref4, atol=1e-4, rtol=1e-4)

    print("KERNEL_OK")
</pallas_src>

<mosaic_0001>
module attributes {stable_mosaic.version = 11 : i64} {
  func.func @kernel(%arg0: i32, %arg1: i32, %arg2: memref<1x8x384xf32, #tpu.memory_space<vmem>>, %arg3: memref<384x384xbf16, #tpu.memory_space<vmem>>, %arg4: memref<1x3x8x128xf32, #tpu.memory_space<vmem>>) attributes {dimension_semantics = [#tpu.dimension_semantics<parallel>, #tpu.dimension_semantics<parallel>], iteration_bounds = array<i64: 2, 1>, scalar_prefetch = 0 : i64, scratch_operands = 0 : i64, tpu.core_type = #tpu.core_type<tc>, window_params = [{transform_indices = @transform_0, window_bounds = array<i64: 1, 8, 384>}, {pipeline_mode = #tpu.pipeline_mode<synchronous>, transform_indices = @transform_1, window_bounds = array<i64: 384, 384>}, {transform_indices = @transform_2, window_bounds = array<i64: 1, 3, 8, 128>}]} {
    %c0 = arith.constant 0 : index
    %c0_0 = arith.constant 0 : index
    %c0_1 = arith.constant 0 : index
    %0 = vector.load %arg2[%c0, %c0_0, %c0_1] : memref<1x8x384xf32, #tpu.memory_space<vmem>>, vector<1x8x384xf32>
    %1 = vector.shape_cast %0 : vector<1x8x384xf32> to vector<8x384xf32>
    %2 = arith.truncf %1 : vector<8x384xf32> to vector<8x384xbf16>
    %3 = arith.extf %2 : vector<8x384xbf16> to vector<8x384xf32>
    %4 = arith.subf %1, %3 : vector<8x384xf32>
    %5 = arith.truncf %4 : vector<8x384xf32> to vector<8x384xbf16>
    %c0_2 = arith.constant 0 : index
    %c0_3 = arith.constant 0 : index
    %6 = vector.load %arg3[%c0_2, %c0_3] : memref<384x384xbf16, #tpu.memory_space<vmem>>, vector<384x128xbf16>
    %cst = arith.constant dense<0.000000e+00> : vector<8x128xf32>
    %7 = tpu.matmul %2, %6, %cst {dimension_numbers = #tpu.dot_dimension_numbers<[1], [0], [0], [1], [0, 0, 1, 1], [], []>} : vector<8x384xbf16>, vector<384x128xbf16>, vector<8x128xf32> -> vector<8x128xf32>
    %cst_4 = arith.constant dense<0.000000e+00> : vector<8x128xf32>
    %8 = tpu.matmul %5, %6, %cst_4 {dimension_numbers = #tpu.dot_dimension_numbers<[1], [0], [0], [1], [0, 0, 1, 1], [], []>} : vector<8x384xbf16>, vector<384x128xbf16>, vector<8x128xf32> -> vector<8x128xf32>
    %9 = arith.addf %7, %8 : vector<8x128xf32>
    %cst_5 = arith.constant 0.0171247534 : f32
    %10 = vector.broadcast %cst_5 : f32 to vector<8x128xf32>
    %11 = arith.mulf %9, %10 : vector<8x128xf32>
    %cst_6 = arith.constant -2.11790395 : f32
    %12 = vector.broadcast %cst_6 : f32 to vector<8x128xf32>
    %13 = arith.addf %11, %12 : vector<8x128xf32>
    %c0_7 = arith.constant 0 : index
    %c0_8 = arith.constant 0 : index
    %c0_9 = arith.constant 0 : index
    %c0_10 = arith.constant 0 : index
    %14 = vector.load %arg4[%c0_7, %c0_8, %c0_9, %c0_10] : memref<1x3x8x128xf32, #tpu.memory_space<vmem>>, vector<1x1x8x128xf32>
    %15 = vector.shape_cast %14 : vector<1x1x8x128xf32> to vector<8x128xf32>
    %16 = vector.shape_cast %13 : vector<8x128xf32> to vector<1x1x8x128xf32>
    tpu.vector_store %arg4[%c0_7, %c0_8, %c0_9, %c0_10], %16 {strides = array<i32>} : memref<1x3x8x128xf32, #tpu.memory_space<vmem>>, vector<1x1x8x128xf32>,
    %c0_11 = arith.constant 0 : index
    %c128 = arith.constant 128 : index
    %17 = vector.load %arg3[%c0_11, %c128] : memref<384x384xbf16, #tpu.memory_space<vmem>>, vector<384x128xbf16>
    %cst_12 = arith.constant dense<0.000000e+00> : vector<8x128xf32>
    %18 = tpu.matmul %2, %17, %cst_12 {dimension_numbers = #tpu.dot_dimension_numbers<[1], [0], [0], [1], [0, 0, 1, 1], [], []>} : vector<8x384xbf16>, vector<384x128xbf16>, vector<8x128xf32> -> vector<8x128xf32>
    %cst_13 = arith.constant dense<0.000000e+00> : vector<8x128xf32>
    %19 = tpu.matmul %5, %17, %cst_13 {dimension_numbers = #tpu.dot_dimension_numbers<[1], [0], [0], [1], [0, 0, 1, 1], [], []>} : vector<8x384xbf16>, vector<384x128xbf16>, vector<8x128xf32> -> vector<8x128xf32>
    %20 = arith.addf %18, %19 : vector<8x128xf32>
    %cst_14 = arith.constant 0.0175070036 : f32
    %21 = vector.broadcast %cst_14 : f32 to vector<8x128xf32>
    %22 = arith.mulf %20, %21 : vector<8x128xf32>
    %cst_15 = arith.constant -2.03571439 : f32
    %23 = vector.broadcast %cst_15 : f32 to vector<8x128xf32>
    %24 = arith.addf %22, %23 : vector<8x128xf32>
    %c0_16 = arith.constant 0 : index
    %c1 = arith.constant 1 : index
    %c0_17 = arith.constant 0 : index
    %c0_18 = arith.constant 0 : index
    %25 = vector.load %arg4[%c0_16, %c1, %c0_17, %c0_18] : memref<1x3x8x128xf32, #tpu.memory_space<vmem>>, vector<1x1x8x128xf32>
    %26 = vector.shape_cast %25 : vector<1x1x8x128xf32> to vector<8x128xf32>
    %27 = vector.shape_cast %24 : vector<8x128xf32> to vector<1x1x8x128xf32>
    tpu.vector_store %arg4[%c0_16, %c1, %c0_17, %c0_18], %27 {strides = array<i32>} : memref<1x3x8x128xf32, #tpu.memory_space<vmem>>, vector<1x1x8x128xf32>,
    %c0_19 = arith.constant 0 : index
    %c256 = arith.constant 256 : index
    %28 = vector.load %arg3[%c0_19, %c256] : memref<384x384xbf16, #tpu.memory_space<vmem>>, vector<384x128xbf16>
    %cst_20 = arith.constant dense<0.000000e+00> : vector<8x128xf32>
    %29 = tpu.matmul %2, %28, %cst_20 {dimension_numbers = #tpu.dot_dimension_numbers<[1], [0], [0], [1], [0, 0, 1, 1], [], []>} : vector<8x384xbf16>, vector<384x128xbf16>, vector<8x128xf32> -> vector<8x128xf32>
    %cst_21 = arith.constant dense<0.000000e+00> : vector<8x128xf32>
    %30 = tpu.matmul %5, %28, %cst_21 {dimension_numbers = #tpu.dot_dimension_numbers<[1], [0], [0], [1], [0, 0, 1, 1], [], []>} : vector<8x384xbf16>, vector<384x128xbf16>, vector<8x128xf32> -> vector<8x128xf32>
    %31 = arith.addf %29, %30 : vector<8x128xf32>
    %cst_22 = arith.constant 0.0174291935 : f32
    %32 = vector.broadcast %cst_22 : f32 to vector<8x128xf32>
    %33 = arith.mulf %31, %32 : vector<8x128xf32>
    %cst_23 = arith.constant -1.80444443 : f32
    %34 = vector.broadcast %cst_23 : f32 to vector<8x128xf32>
    %35 = arith.addf %33, %34 : vector<8x128xf32>
    %c0_24 = arith.constant 0 : index
    %c2 = arith.constant 2 : index
    %c0_25 = arith.constant 0 : index
    %c0_26 = arith.constant 0 : index
    %36 = vector.load %arg4[%c0_24, %c2, %c0_25, %c0_26] : memref<1x3x8x128xf32, #tpu.memory_space<vmem>>, vector<1x1x8x128xf32>
    %37 = vector.shape_cast %36 : vector<1x1x8x128xf32> to vector<8x128xf32>
    %38 = vector.shape_cast %35 : vector<8x128xf32> to vector<1x1x8x128xf32>
    tpu.vector_store %arg4[%c0_24, %c2, %c0_25, %c0_26], %38 {strides = array<i32>} : memref<1x3x8x128xf32, #tpu.memory_space<vmem>>, vector<1x1x8x128xf32>,
    return
  }
  func.func @transform_0(%arg0: i32, %arg1: i32) -> (i32, i32, i32) {
    %c0_i32 = arith.constant 0 : i32
    %c0_i32_0 = arith.constant 0 : i32
    return %arg0, %arg1, %c0_i32 : i32, i32, i32
  }
  func.func @transform_1(%arg0: i32, %arg1: i32) -> (i32, i32) {
    %c0_i32 = arith.constant 0 : i32
    %c0_i32_0 = arith.constant 0 : i32
    %c0_i32_1 = arith.constant 0 : i32
    return %c0_i32, %c0_i32_0 : i32, i32
  }
  func.func @transform_2(%arg0: i32, %arg1: i32) -> (i32, i32, i32, i32) {
    %c0_i32 = arith.constant 0 : i32
    %c0_i32_0 = arith.constant 0 : i32
    %c0_i32_1 = arith.constant 0 : i32
    return %arg0, %c0_i32, %arg1, %c0_i32_0 : i32, i32, i32, i32
  }
}

</mosaic_0001>

<llo_original>
// kernel: _lambda_.1
$region0: #{_lambda_.1}
  #allocation0 [shape = 'u32[]', space=smem, size = 0x4, offset = 0x4, fixed_abs, tag = 'smem constant byte address 0x4 - core index']
  #allocation1 [shape = 'u32[144,128]{1,0:T(1,128)}', space=vmem, size = 0x12000, scoped, tag = 'internal scratch']
  %s0 = inlined_call_operand.vmem [shape: f32[2,8,384], index: 0, kind: input, shape index: {}]
  %s1 = inlined_call_operand.vmem [shape: bf16[384,384], index: 1, kind: input, shape index: {}]
  %s2 = inlined_call_operand.vmem [shape: f32[2,3,8,128], index: 2, kind: output, shape index: {}]
  %s3 = sld [smem:[#allocation0]]
  $region41: #{_lambda_.1} parent=0
    _
  %s5 = ssub.s32 1, %s3
  %s6 = scalar_select 0, %s5, %s3
  loop: start=0, step=1, limit=4
  $region2: #{_lambda_.1} parent=0 // loop_pre_header
    _
  $region3: #{_lambda_.1} parent=0 // loop_header
    %s8 = sphi 0, %s12
    %p9 = scmp.ge.s32.totalorder %s8, 4
    %s15 = sphi 0, %s27
    %s16 = sphi 0, %s23
    %s17 = sphi 0, %s15
    %s18 = sphi 0, %s16
    %s19 = sphi 0, %s17
    %s20 = sphi 0, %s18
    %s32 = sphi 0, %s34
    %s35 = sphi 0, %s32
    %s36 = sphi 0, %s35
    %s52 = sphi 0, %s36
    %s56 = sphi 0, %s56
    %s58 = sphi 0, %s56
    %s59 = sphi 0, %s58
    %s73 = sphi 0, %s59
    %s81 = sphi 0, %s83
    %s84 = sphi 0, %s81
    %s85 = sphi 0, %s84
    %s101 = sphi 0, %s85
  $region4: #{_lambda_.1} parent=0 // loop_header_branch
    %11 = sbr.rel (%p9) target = $region8
  $region5: #{_lambda_.1} parent=0 // loop_body
    %s13 = ssub.s32 %s8, 1
    %s14 = ssub.s32 %s8, 2
    %s21 = sadd.s32 1, %s16
    %p22 = scmp.ge.s32.totalorder %s21, 1
    %s23 = scalar_select %p22, 0, %s21
    %s24 = sadd.s32 1, %s15
    %s25 = scalar_select %p22, %s24, %s15
    %p26 = scmp.ge.s32.totalorder %s25, 2
    %s27 = scalar_select %p26, 0, %s25
    %s28 = ssub.s32 %s15, %s27
    %s29 = ssub.s32 %s16, %s23
    %s30 = sor.u32 %s28, %s29
    %p31 = scmp.eq.s32.totalorder %s30, 0
    %s33 = sadd.s32 %s32, 1
    %s34 = scalar_select %p31, %s32, %s33
    %p37 = pneg %p31
    %p38 = scmp.eq.s32.totalorder %s8, 1
    %p39 = por %p37, %p38
    %p40 = scmp.ne.s32.totalorder %s32, %s35
    %p41 = scmp.eq.s32.totalorder %s8, 0
    %p42 = por %p40, %p41
    %p43 = scmp.ne.s32.totalorder %s32, %s35
    %p44 = scmp.eq.s32.totalorder %s13, 1
    %p45 = por %p43, %p44
    %p46 = scmp.ne.s32.totalorder %s35, %s36
    %p47 = scmp.eq.s32.totalorder %s13, 0
    %p48 = por %p46, %p47
    %p49 = scmp.ne.s32.totalorder %s35, %s36
    %p50 = scmp.eq.s32.totalorder %s14, 1
    %p51 = por %p49, %p50
    %p53 = scmp.ne.s32.totalorder %s36, %s52
    %p54 = scmp.eq.s32.totalorder %s14, 0
    %p55 = por %p53, %p54
    %s57 = sadd.s32 %s56, 1
    %p60 = scmp.eq.s32.totalorder %s8, 1
    %p61 = scmp.ne.s32.totalorder %s56, %s58
    %p62 = scmp.eq.s32.totalorder %s8, 0
    %p63 = por %p61, %p62
    %p64 = scmp.ne.s32.totalorder %s56, %s58
    %p65 = scmp.eq.s32.totalorder %s13, 1
    %p66 = por %p64, %p65
    %p67 = scmp.ne.s32.totalorder %s58, %s59
    %p68 = scmp.eq.s32.totalorder %s13, 0
    %p69 = por %p67, %p68
    %p70 = scmp.ne.s32.totalorder %s58, %s59
    %p71 = scmp.eq.s32.totalorder %s14, 1
    %p72 = por %p70, %p71
    %p74 = scmp.ne.s32.totalorder %s59, %s73
    %p75 = scmp.eq.s32.totalorder %s14, 0
    %p76 = por %p74, %p75
    %s77 = ssub.s32 %s15, %s27
    %s78 = ssub.s32 %s16, %s23
    %s79 = sor.u32 %s77, %s78
    %p80 = scmp.eq.s32.totalorder %s79, 0
    %s82 = sadd.s32 %s81, 1
    %s83 = scalar_select %p80, %s81, %s82
    %p86 = pneg %p80
    %p87 = scmp.eq.s32.totalorder %s8, 1
    %p88 = por %p86, %p87
    %p89 = scmp.ne.s32.totalorder %s81, %s84
    %p90 = scmp.eq.s32.totalorder %s8, 0
    %p91 = por %p89, %p90
    %p92 = scmp.ne.s32.totalorder %s81, %s84
    %p93 = scmp.eq.s32.totalorder %s13, 1
    %p94 = por %p92, %p93
    %p95 = scmp.ne.s32.totalorder %s84, %s85
    %p96 = scmp.eq.s32.totalorder %s13, 0
    %p97 = por %p95, %p96
    %p98 = scmp.ne.s32.totalorder %s84, %s85
    %p99 = scmp.eq.s32.totalorder %s14, 1
    %p100 = por %p98, %p99
    %p102 = scmp.ne.s32.totalorder %s85, %s101
    %p103 = scmp.eq.s32.totalorder %s14, 0
    %p104 = por %p102, %p103
    %p105 = scmp.le.s32.totalorder 1, %s8
    %p106 = scmp.lt.s32.totalorder %s8, 3
    %p107 = pnand %p105, %p106
    %p108 = pneg %p107
    // Predicated region
    $region9: #{_lambda_.1} parent=5 // pred_check
      _
    $region10: #{_lambda_.1} parent=5 // pred_check_branch
      %110 = sbr.rel (%p107) target = $region12
    $region11: #{_lambda_.1} parent=5 // pred_region
      %s111 = ssub.s32 %s8, 1
      // Predicated region
      $region13: #{_lambda_.1} parent=11 // pred_check
        %p112 = pneg %p69
      $region14: #{_lambda_.1} parent=11 // pred_check_branch
        %114 = sbr.rel (%p112) target = $region16
      $region15: #{_lambda_.1} parent=11 // pred_region
        _
      $region16: #{_lambda_.1} parent=11 // pred_fallthru
        _
    $region12: #{_lambda_.1} parent=5 // pred_fallthru
      _
    %p115 = scmp.lt.s32.totalorder %s8, 2
    // Predicated region
    $region17: #{_lambda_.1} parent=5 // pred_check
      %p116 = pneg %p115
    $region18: #{_lambda_.1} parent=5 // pred_check_branch
      %118 = sbr.rel (%p116) target = $region20
    $region19: #{_lambda_.1} parent=5 // pred_region
      // Predicated region
      $region21: #{_lambda_.1} parent=19 // pred_check
        %p119 = pneg %p42
      $region22: #{_lambda_.1} parent=19 // pred_check_branch
        %121 = sbr.rel (%p119) target = $region24
      $region23: #{_lambda_.1} parent=19 // pred_region
        %p122 = scmp.lt.s32.totalorder %s15, 1
        %s123 = scalar_select %p122, %s15, 1
        %p124 = scmp.lt.s32.totalorder %s16, 0
        %s125 = scalar_select %p124, %s16, 0
        %s126 = smul.addr %s125, 3
        %s127 = smul.addr %s123, 3
        %s128 = sadd.s32 %s126, %s127
        %s129 = smul.addr %s128, 8
        %s130 = scalar_lea.vmem %s0, %s129
      $region24: #{_lambda_.1} parent=19 // pred_fallthru
        _
    $region20: #{_lambda_.1} parent=5 // pred_fallthru
      _
    %p131 = scmp.le.s32.totalorder 1, %s8
    %p132 = scmp.lt.s32.totalorder %s8, 3
    %p133 = pnand %p131, %p132
    %p134 = pneg %p133
    // Predicated region
    $region25: #{_lambda_.1} parent=5 // pred_check
      _
    $region26: #{_lambda_.1} parent=5 // pred_check_branch
      %136 = sbr.rel (%p133) target = $region28
    $region27: #{_lambda_.1} parent=5 // pred_region
      %s137 = ssub.s32 %s8, 1
      %p138 = scmp.lt.s32.totalorder %s17, 1
      %s139 = scalar_select %p138, %s17, 1
      %p140 = scmp.lt.s32.totalorder %s18, 0
      %s141 = scalar_select %p140, %s18, 0
      %s142 = smul.addr %s141, 3
      %s143 = smul.addr %s139, 3
      %s144 = sadd.s32 %s142, %s143
      %s145 = smul.addr %s144, 8
      %s146 = scalar_lea.vmem %s0, %s145
      %p147 = pneg %p48
      %p148 = pneg %p45
      %p149 = pneg %p69
      %p150 = pneg %p66
      %p151 = pneg %p97
      %p152 = pneg %p94
      %p153 = scmp.lt.s32.totalorder %s17, 1
      %s154 = scalar_select %p153, %s17, 1
      %p155 = scmp.lt.s32.totalorder %s18, 0
      %s156 = scalar_select %p155, %s18, 0
      %s157 = smul.addr %s154, 3
      %s158 = sadd.s32 %s156, %s157
      %s159 = smul.addr %s158, 8
      %s160 = scalar_lea.vmem %s2, %s159
      %p161 = scmp.lt.s32.totalorder %s17, 1
      %s162 = scalar_select %p161, %s17, 1
      %p163 = scmp.lt.s32.totalorder %s18, 0
      %s164 = scalar_select %p163, %s18, 0
      %s165 = smul.addr %s164, 3
      %s166 = smul.addr %s162, 3
      %s167 = sadd.s32 %s165, %s166
      %s168 = smul.addr %s167, 8
      %s169 = scalar_lea.vmem %s0, %s168
      %p170 = scmp.lt.s32.totalorder %s17, 1
      %s171 = scalar_select %p170, %s17, 1
      %p172 = scmp.lt.s32.totalorder %s18, 0
      %s173 = scalar_select %p172, %s18, 0
      %s174 = smul.addr %s171, 3
      %s175 = sadd.s32 %s173, %s174
      %s176 = smul.addr %s175, 8
      %s177 = scalar_lea.vmem %s2, %s176
      %v179 = vld [vmem:[%s169] sm:$0xff]
      %v180 = vld [vmem:[%s169 + $0x8] sm:$0xff]
      %v181 = vld [vmem:[%s169 + $0x10] sm:$0xff]
      %v182 = vpack.c.bf16 %v179, %v179
      %v183 = vpack.c.bf16 %v180, %v180
      %v184 = vpack.c.bf16 %v181, %v181
      %v185 = vunpack.c.l.bf16 %v182
      %v186 = vunpack.c.l.bf16 %v183
      %v187 = vunpack.c.l.bf16 %v184
      %v188 = vsub.f32 %v179, %v185
      %v189 = vsub.f32 %v180, %v186
      %v190 = vsub.f32 %v181, %v187
      %v191 = vpack.c.bf16 %v188, %v188
      %v192 = vpack.c.bf16 %v189, %v189
      %v193 = vpack.c.bf16 %v190, %v190
      %v194 = vld [vmem:[%s1] sm:$0xf]
      %v195 = vld [vmem:[%s1 + $0xc] sm:$0xf]
      %v196 = vld [vmem:[%s1 + $0x18] sm:$0xf]
      %v197 = vld [vmem:[%s1 + $0x24] sm:$0xf]
      %v198 = vld [vmem:[%s1 + $0x30] sm:$0xf]
      %v199 = vld [vmem:[%s1 + $0x3c] sm:$0xf]
      %v200 = vld [vmem:[%s1 + $0x48] sm:$0xf]
      %v201 = vld [vmem:[%s1 + $0x54] sm:$0xf]
      %v202 = vld [vmem:[%s1 + $0x60] sm:$0xf]
      %v203 = vld [vmem:[%s1 + $0x6c] sm:$0xf]
      %v204 = vld [vmem:[%s1 + $0x78] sm:$0xf]
      %v205 = vld [vmem:[%s1 + $0x84] sm:$0xf]
      %v206 = vld [vmem:[%s1 + $0x90] sm:$0xf]
      %v207 = vld [vmem:[%s1 + $0x9c] sm:$0xf]
      %v208 = vld [vmem:[%s1 + $0xa8] sm:$0xf]
      %v209 = vld [vmem:[%s1 + $0xb4] sm:$0xf]
      %v210 = vld [vmem:[%s1 + $0xc0] sm:$0xf]
      %v211 = vld [vmem:[%s1 + $0xcc] sm:$0xf]
      %v212 = vld [vmem:[%s1 + $0xd8] sm:$0xf]
      %v213 = vld [vmem:[%s1 + $0xe4] sm:$0xf]
      %v214 = vld [vmem:[%s1 + $0xf0] sm:$0xf]
      %v215 = vld [vmem:[%s1 + $0xfc] sm:$0xf]
      %v216 = vld [vmem:[%s1 + $0x108] sm:$0xf]
      %v217 = vld [vmem:[%s1 + $0x114] sm:$0xf]
      %v218 = vld [vmem:[%s1 + $0x120] sm:$0xf]
      %v219 = vld [vmem:[%s1 + $0x12c] sm:$0xf]
      %v220 = vld [vmem:[%s1 + $0x138] sm:$0xf]
      %v221 = vld [vmem:[%s1 + $0x144] sm:$0xf]
      %v222 = vld [vmem:[%s1 + $0x150] sm:$0xf]
      %v223 = vld [vmem:[%s1 + $0x15c] sm:$0xf]
      %v224 = vld [vmem:[%s1 + $0x168] sm:$0xf]
      %v225 = vld [vmem:[%s1 + $0x174] sm:$0xf]
      %v226 = vld [vmem:[%s1 + $0x180] sm:$0xf]
      %v227 = vld [vmem:[%s1 + $0x18c] sm:$0xf]
      %v228 = vld [vmem:[%s1 + $0x198] sm:$0xf]
      %v229 = vld [vmem:[%s1 + $0x1a4] sm:$0xf]
      %v230 = vld [vmem:[%s1 + $0x1b0] sm:$0xf]
      %v231 = vld [vmem:[%s1 + $0x1bc] sm:$0xf]
      %v232 = vld [vmem:[%s1 + $0x1c8] sm:$0xf]
      %v233 = vld [vmem:[%s1 + $0x1d4] sm:$0xf]
      %v234 = vld [vmem:[%s1 + $0x1e0] sm:$0xf]
      %v235 = vld [vmem:[%s1 + $0x1ec] sm:$0xf]
      %v236 = vld [vmem:[%s1 + $0x1f8] sm:$0xf]
      %v237 = vld [vmem:[%s1 + $0x204] sm:$0xf]
      %v238 = vld [vmem:[%s1 + $0x210] sm:$0xf]
      %v239 = vld [vmem:[%s1 + $0x21c] sm:$0xf]
      %v240 = vld [vmem:[%s1 + $0x228] sm:$0xf]
      %v241 = vld [vmem:[%s1 + $0x234] sm:$0xf]
      %v290 = vunpack.c.l.b16 %v194
      %v291 = vunpack.c.l.b16 %v195
      %v292 = vunpack.c.l.b16 %v196
      %v293 = vunpack.c.l.b16 %v197
      %v294 = vunpack.c.l.b16 %v198
      %v295 = vunpack.c.l.b16 %v199
      %v296 = vunpack.c.l.b16 %v200
      %v297 = vunpack.c.l.b16 %v201
      %v298 = vunpack.c.l.b16 %v202
      %v299 = vunpack.c.l.b16 %v203
      %v300 = vunpack.c.l.b16 %v204
      %v301 = vunpack.c.l.b16 %v205
      %v302 = vunpack.c.l.b16 %v206
      %v303 = vunpack.c.l.b16 %v207
      %v304 = vunpack.c.l.b16 %v208
      %v305 = vunpack.c.l.b16 %v209
      %v306 = vunpack.c.l.b16 %v210
      %v307 = vunpack.c.l.b16 %v211
      %v308 = vunpack.c.l.b16 %v212
      %v309 = vunpack.c.l.b16 %v213
      %v310 = vunpack.c.l.b16 %v214
      %v311 = vunpack.c.l.b16 %v215
      %v312 = vunpack.c.l.b16 %v216
      %v313 = vunpack.c.l.b16 %v217
      %v314 = vunpack.c.l.b16 %v218
      %v315 = vunpack.c.l.b16 %v219
      %v316 = vunpack.c.l.b16 %v220
      %v317 = vunpack.c.l.b16 %v221
      %v318 = vunpack.c.l.b16 %v222
      %v319 = vunpack.c.l.b16 %v223
      %v320 = vunpack.c.l.b16 %v224
      %v321 = vunpack.c.l.b16 %v225
      %v322 = vunpack.c.l.b16 %v226
      %v323 = vunpack.c.l.b16 %v227
      %v324 = vunpack.c.l.b16 %v228
      %v325 = vunpack.c.l.b16 %v229
      %v326 = vunpack.c.l.b16 %v230
      %v327 = vunpack.c.l.b16 %v231
      %v328 = vunpack.c.l.b16 %v232
      %v329 = vunpack.c.l.b16 %v233
      %v330 = vunpack.c.l.b16 %v234
      %v331 = vunpack.c.l.b16 %v235
      %v332 = vunpack.c.l.b16 %v236
      %v333 = vunpack.c.l.b16 %v237
      %v334 = vunpack.c.l.b16 %v238
      %v335 = vunpack.c.l.b16 %v239
      %v336 = vunpack.c.l.b16 %v240
      %v337 = vunpack.c.l.b16 %v241
      %v338 = vpack.c.b16 %v291, %v290
      %v339 = vpack.c.b16 %v293, %v292
      %v340 = vpack.c.b16 %v295, %v294
      %v341 = vpack.c.b16 %v297, %v296
      %v342 = vpack.c.b16 %v299, %v298
      %v343 = vpack.c.b16 %v301, %v300
      %v344 = vpack.c.b16 %v303, %v302
      %v345 = vpack.c.b16 %v305, %v304
      %v346 = vpack.c.b16 %v307, %v306
      %v347 = vpack.c.b16 %v309, %v308
      %v348 = vpack.c.b16 %v311, %v310
      %v349 = vpack.c.b16 %v313, %v312
      %v350 = vpack.c.b16 %v315, %v314
      %v351 = vpack.c.b16 %v317, %v316
      %v352 = vpack.c.b16 %v319, %v318
      %v353 = vpack.c.b16 %v321, %v320
      %v354 = vpack.c.b16 %v323, %v322
      %v355 = vpack.c.b16 %v325, %v324
      %v356 = vpack.c.b16 %v327, %v326
      %v357 = vpack.c.b16 %v329, %v328
      %v358 = vpack.c.b16 %v331, %v330
      %v359 = vpack.c.b16 %v333, %v332
      %v360 = vpack.c.b16 %v335, %v334
      %v361 = vpack.c.b16 %v337, %v336
      %386 = vmatprep.subr.bf16.mxu0 0
      %387 = vmatpush1.bf16.msra.mxu0 %v338
      %388 = vmatprep.subr.bf16.mxu0 0
      %389 = vmatpush1.bf16.msra.mxu0 %v339
      %390 = vmatprep.subr.bf16.mxu0 0
      %391 = vmatpush1.bf16.msra.mxu0 %v340
      %392 = vmatprep.subr.bf16.mxu0 0
      %393 = vmatpush1.bf16.msra.mxu0 %v341
      %394 = vmatprep.subr.bf16.mxu0 0
      %395 = vmatpush1.bf16.msra.mxu0 %v342
      %396 = vmatprep.subr.bf16.mxu0 0
      %397 = vmatpush1.bf16.msra.mxu0 %v343
      %398 = vmatprep.subr.bf16.mxu0 0
      %399 = vmatpush1.bf16.msra.mxu0 %v344
      %400 = vmatprep.subr.bf16.mxu0 0
      %401 = vmatpush1.bf16.msra.mxu0 %v345
      %402 = vmatprep.subr.bf16.mxu0 0
      %403 = vmatpush1.bf16.msra.mxu0 %v346
      %404 = vmatprep.subr.bf16.mxu0 0
      %405 = vmatpush1.bf16.msra.mxu0 %v347
      %406 = vmatprep.subr.bf16.mxu0 0
      %407 = vmatpush1.bf16.msra.mxu0 %v348
      %408 = vmatprep.subr.bf16.mxu0 0
      %409 = vmatpush1.bf16.msra.mxu0 %v349
      %410 = vmatprep.subr.bf16.mxu0 0
      %411 = vmatpush1.bf16.msra.mxu0 %v350
      %412 = vmatprep.subr.bf16.mxu0 0
      %413 = vmatpush1.bf16.msra.mxu0 %v351
      %414 = vmatprep.subr.bf16.mxu0 0
      %415 = vmatpush1.bf16.msra.mxu0 %v352
      %416 = vmatprep.subr.bf16.mxu0 0
      %417 = vmatpush1.bf16.msra.mxu0 %v353
      %418 = vmatprep.mubr.bf16.mxu0 %v192
      %419 = vmatmul.mubr.bf16.gmra.mrb[0].mxu0 %v191
      %v420 = vpop.f32.mrb[0].mxu0
      %v421 = vadd.f32 0.0, %v420
      %v422 = vpop.f32.mrb[0].mxu0
      %v423 = vpop.f32.mrb[0].mxu0
      %v424 = vpop.f32.mrb[0].mxu0
      %425 = vdwg.mxu0
      %426 = vmatprep.subr.bf16.mxu0 0
      %427 = vmatpush1.bf16.msra.mxu0 %v354
      %428 = vmatprep.subr.bf16.mxu0 0
      %429 = vmatpush1.bf16.msra.mxu0 %v355
      %430 = vmatprep.subr.bf16.mxu0 0
      %431 = vmatpush1.bf16.msra.mxu0 %v356
      %432 = vmatprep.subr.bf16.mxu0 0
      %433 = vmatpush1.bf16.msra.mxu0 %v357
      %434 = vmatprep.subr.bf16.mxu0 0
      %435 = vmatpush1.bf16.msra.mxu0 %v358
      %436 = vmatprep.subr.bf16.mxu0 0
      %437 = vmatpush1.bf16.msra.mxu0 %v359
      %438 = vmatprep.subr.bf16.mxu0 0
      %439 = vmatpush1.bf16.msra.mxu0 %v360
      %440 = vmatprep.subr.bf16.mxu0 0
      %441 = vmatpush1.bf16.msra.mxu0 %v361
      %442 = vmatprep.subr.bf16.mxu0 0
      %443 = vmatpush1.bf16.msra.mxu0 0
      %444 = vmatprep.subr.bf16.mxu0 0
      %445 = vmatpush1.bf16.msra.mxu0 0
      %446 = vmatprep.subr.bf16.mxu0 0
      %447 = vmatpush1.bf16.msra.mxu0 0
      %448 = vmatprep.subr.bf16.mxu0 0
      %449 = vmatpush1.bf16.msra.mxu0 0
      %450 = vmatprep.subr.bf16.mxu0 0
      %451 = vmatpush1.bf16.msra.mxu0 0
      %452 = vmatprep.subr.bf16.mxu0 0
      %453 = vmatpush1.bf16.msra.mxu0 0
      %454 = vmatprep.subr.bf16.mxu0 0
      %455 = vmatpush1.bf16.msra.mxu0 0
      %456 = vmatprep.subr.bf16.mxu0 0
      %457 = vmatpush1.bf16.msra.mxu0 0
      %458 = vmatprep.mubr.bf16.mxu0 0
      %459 = vmatmul.mubr.bf16.gmra.mrb[0].mxu0 %v193
      %v460 = vpop.f32.mrb[0].mxu0
      %v461 = vadd.f32 %v421, %v460
      %v462 = vpop.f32.mrb[0].mxu0
      %v463 = vpop.f32.mrb[0].mxu0
      %v464 = vpop.f32.mrb[0].mxu0
      %465 = vdwg.mxu0
      %466 = vmatprep.subr.bf16.mxu0 0
      %467 = vmatpush1.bf16.msra.mxu0 %v338
      %468 = vmatprep.subr.bf16.mxu0 0
      %469 = vmatpush1.bf16.msra.mxu0 %v339
      %470 = vmatprep.subr.bf16.mxu0 0
      %471 = vmatpush1.bf16.msra.mxu0 %v340
      %472 = vmatprep.subr.bf16.mxu0 0
      %473 = vmatpush1.bf16.msra.mxu0 %v341
      %474 = vmatprep.subr.bf16.mxu0 0
      %475 = vmatpush1.bf16.msra.mxu0 %v342
      %476 = vmatprep.subr.bf16.mxu0 0
      %477 = vmatpush1.bf16.msra.mxu0 %v343
      %478 = vmatprep.subr.bf16.mxu0 0
      %479 = vmatpush1.bf16.msra.mxu0 %v344
      %480 = vmatprep.subr.bf16.mxu0 0
      %481 = vmatpush1.bf16.msra.mxu0 %v345
      %482 = vmatprep.subr.bf16.mxu0 0
      %483 = vmatpush1.bf16.msra.mxu0 %v346
      %484 = vmatprep.subr.bf16.mxu0 0
      %485 = vmatpush1.bf16.msra.mxu0 %v347
      %486 = vmatprep.subr.bf16.mxu0 0
      %487 = vmatpush1.bf16.msra.mxu0 %v348
      %488 = vmatprep.subr.bf16.mxu0 0
      %489 = vmatpush1.bf16.msra.mxu0 %v349
      %490 = vmatprep.subr.bf16.mxu0 0
      %491 = vmatpush1.bf16.msra.mxu0 %v350
      %492 = vmatprep.subr.bf16.mxu0 0
      %493 = vmatpush1.bf16.msra.mxu0 %v351
      %494 = vmatprep.subr.bf16.mxu0 0
      %495 = vmatpush1.bf16.msra.mxu0 %v352
      %496 = vmatprep.subr.bf16.mxu0 0
      %497 = vmatpush1.bf16.msra.mxu0 %v353
      %498 = vmatprep.mubr.bf16.mxu0 %v183
      %499 = vmatmul.mubr.bf16.gmra.mrb[0].mxu0 %v182
      %v500 = vpop.f32.mrb[0].mxu0
      %v501 = vadd.f32 %v461, %v500
      %v502 = vpop.f32.mrb[0].mxu0
      %v503 = vpop.f32.mrb[0].mxu0
      %v504 = vpop.f32.mrb[0].mxu0
      %505 = vdwg.mxu0
      %506 = vmatprep.subr.bf16.mxu0 0
      %507 = vmatpush1.bf16.msra.mxu0 %v354
      %508 = vmatprep.subr.bf16.mxu0 0
      %509 = vmatpush1.bf16.msra.mxu0 %v355
      %510 = vmatprep.subr.bf16.mxu0 0
      %511 = vmatpush1.bf16.msra.mxu0 %v356
      %512 = vmatprep.subr.bf16.mxu0 0
      %513 = vmatpush1.bf16.msra.mxu0 %v357
      %514 = vmatprep.subr.bf16.mxu0 0
      %515 = vmatpush1.bf16.msra.mxu0 %v358
      %516 = vmatprep.subr.bf16.mxu0 0
      %517 = vmatpush1.bf16.msra.mxu0 %v359
      %518 = vmatprep.subr.bf16.mxu0 0
      %519 = vmatpush1.bf16.msra.mxu0 %v360
      %520 = vmatprep.subr.bf16.mxu0 0
      %521 = vmatpush1.bf16.msra.mxu0 %v361
      %522 = vmatprep.subr.bf16.mxu0 0
      %523 = vmatpush1.bf16.msra.mxu0 0
      %524 = vmatprep.subr.bf16.mxu0 0
      %525 = vmatpush1.bf16.msra.mxu0 0
      %526 = vmatprep.subr.bf16.mxu0 0
      %527 = vmatpush1.bf16.msra.mxu0 0
      %528 = vmatprep.subr.bf16.mxu0 0
      %529 = vmatpush1.bf16.msra.mxu0 0
      %530 = vmatprep.subr.bf16.mxu0 0
      %531 = vmatpush1.bf16.msra.mxu0 0
      %532 = vmatprep.subr.bf16.mxu0 0
      %533 = vmatpush1.bf16.msra.mxu0 0
      %534 = vmatprep.subr.bf16.mxu0 0
      %535 = vmatpush1.bf16.msra.mxu0 0
      %536 = vmatprep.subr.bf16.mxu0 0
      %537 = vmatpush1.bf16.msra.mxu0 0
      %538 = vmatprep.mubr.bf16.mxu0 0
      %539 = vmatmul.mubr.bf16.gmra.mrb[0].mxu0 %v184
      %v540 = vpop.f32.mrb[0].mxu0
      %v541 = vadd.f32 %v501, %v540
      %v542 = vpop.f32.mrb[0].mxu0
      %v543 = vpop.f32.mrb[0].mxu0
      %v544 = vpop.f32.mrb[0].mxu0
      %545 = vdwg.mxu0
      %v546 = vmul.f32 %v541, 0.017124753
      %v547 = vadd.f32 %v546, -2.117904
      %548 = vst [vmem:[%s177] sm:$0xff] %v547
      %v549 = vld [vmem:[%s1 + $0x4] sm:$0xf]
      %v550 = vld [vmem:[%s1 + $0x10] sm:$0xf]
      %v551 = vld [vmem:[%s1 + $0x1c] sm:$0xf]
      %v552 = vld [vmem:[%s1 + $0x28] sm:$0xf]
      %v553 = vld [vmem:[%s1 + $0x34] sm:$0xf]
      %v554 = vld [vmem:[%s1 + $0x40] sm:$0xf]
      %v555 = vld [vmem:[%s1 + $0x4c] sm:$0xf]
      %v556 = vld [vmem:[%s1 + $0x58] sm:$0xf]
      %v557 = vld [vmem:[%s1 + $0x64] sm:$0xf]
      %v558 = vld [vmem:[%s1 + $0x70] sm:$0xf]
      %v559 = vld [vmem:[%s1 + $0x7c] sm:$0xf]
      %v560 = vld [vmem:[%s1 + $0x88] sm:$0xf]
      %v561 = vld [vmem:[%s1 + $0x94] sm:$0xf]
      %v562 = vld [vmem:[%s1 + $0xa0] sm:$0xf]
      %v563 = vld [vmem:[%s1 + $0xac] sm:$0xf]
      %v564 = vld [vmem:[%s1 + $0xb8] sm:$0xf]
      %v565 = vld [vmem:[%s1 + $0xc4] sm:$0xf]
      %v566 = vld [vmem:[%s1 + $0xd0] sm:$0xf]
      %v567 = vld [vmem:[%s1 + $0xdc] sm:$0xf]
      %v568 = vld [vmem:[%s1 + $0xe8] sm:$0xf]
      %v569 = vld [vmem:[%s1 + $0xf4] sm:$0xf]
      %v570 = vld [vmem:[%s1 + $0x100] sm:$0xf]
      %v571 = vld [vmem:[%s1 + $0x10c] sm:$0xf]
      %v572 = vld [vmem:[%s1 + $0x118] sm:$0xf]
      %v573 = vld [vmem:[%s1 + $0x124] sm:$0xf]
      %v574 = vld [vmem:[%s1 + $0x130] sm:$0xf]
      %v575 = vld [vmem:[%s1 + $0x13c] sm:$0xf]
      %v576 = vld [vmem:[%s1 + $0x148] sm:$0xf]
      %v577 = vld [vmem:[%s1 + $0x154] sm:$0xf]
      %v578 = vld [vmem:[%s1 + $0x160] sm:$0xf]
      %v579 = vld [vmem:[%s1 + $0x16c] sm:$0xf]
      %v580 = vld [vmem:[%s1 + $0x178] sm:$0xf]
      %v581 = vld [vmem:[%s1 + $0x184] sm:$0xf]
      %v582 = vld [vmem:[%s1 + $0x190] sm:$0xf]
      %v583 = vld [vmem:[%s1 + $0x19c] sm:$0xf]
      %v584 = vld [vmem:[%s1 + $0x1a8] sm:$0xf]
      %v585 = vld [vmem:[%s1 + $0x1b4] sm:$0xf]
      %v586 = vld [vmem:[%s1 + $0x1c0] sm:$0xf]
      %v587 = vld [vmem:[%s1 + $0x1cc] sm:$0xf]
      %v588 = vld [vmem:[%s1 + $0x1d8] sm:$0xf]
      %v589 = vld [vmem:[%s1 + $0x1e4] sm:$0xf]
      %v590 = vld [vmem:[%s1 + $0x1f0] sm:$0xf]
      %v591 = vld [vmem:[%s1 + $0x1fc] sm:$0xf]
      %v592 = vld [vmem:[%s1 + $0x208] sm:$0xf]
      %v593 = vld [vmem:[%s1 + $0x214] sm:$0xf]
      %v594 = vld [vmem:[%s1 + $0x220] sm:$0xf]
      %v595 = vld [vmem:[%s1 + $0x22c] sm:$0xf]
      %v596 = vld [vmem:[%s1 + $0x238] sm:$0xf]
      %v645 = vunpack.c.l.b16 %v549
      %v646 = vunpack.c.l.b16 %v550
      %v647 = vunpack.c.l.b16 %v551
      %v648 = vunpack.c.l.b16 %v552
      %v649 = vunpack.c.l.b16 %v553
      %v650 = vunpack.c.l.b16 %v554
      %v651 = vunpack.c.l.b16 %v555
      %v652 = vunpack.c.l.b16 %v556
      %v653 = vunpack.c.l.b16 %v557
      %v654 = vunpack.c.l.b16 %v558
      %v655 = vunpack.c.l.b16 %v559
      %v656 = vunpack.c.l.b16 %v560
      %v657 = vunpack.c.l.b16 %v561
      %v658 = vunpack.c.l.b16 %v562
      %v659 = vunpack.c.l.b16 %v563
      %v660 = vunpack.c.l.b16 %v564
      %v661 = vunpack.c.l.b16 %v565
      %v662 = vunpack.c.l.b16 %v566
      %v663 = vunpack.c.l.b16 %v567
      %v664 = vunpack.c.l.b16 %v568
      %v665 = vunpack.c.l.b16 %v569
      %v666 = vunpack.c.l.b16 %v570
      %v667 = vunpack.c.l.b16 %v571
      %v668 = vunpack.c.l.b16 %v572
      %v669 = vunpack.c.l.b16 %v573
      %v670 = vunpack.c.l.b16 %v574
      %v671 = vunpack.c.l.b16 %v575
      %v672 = vunpack.c.l.b16 %v576
      %v673 = vunpack.c.l.b16 %v577
      %v674 = vunpack.c.l.b16 %v578
      %v675 = vunpack.c.l.b16 %v579
      %v676 = vunpack.c.l.b16 %v580
      %v677 = vunpack.c.l.b16 %v581
      %v678 = vunpack.c.l.b16 %v582
      %v679 = vunpack.c.l.b16 %v583
      %v680 = vunpack.c.l.b16 %v584
      %v681 = vunpack.c.l.b16 %v585
      %v682 = vunpack.c.l.b16 %v586
      %v683 = vunpack.c.l.b16 %v587
      %v684 = vunpack.c.l.b16 %v588
      %v685 = vunpack.c.l.b16 %v589
      %v686 = vunpack.c.l.b16 %v590
      %v687 = vunpack.c.l.b16 %v591
      %v688 = vunpack.c.l.b16 %v592
      %v689 = vunpack.c.l.b16 %v593
      %v690 = vunpack.c.l.b16 %v594
      %v691 = vunpack.c.l.b16 %v595
      %v692 = vunpack.c.l.b16 %v596
      %v693 = vpack.c.b16 %v646, %v645
      %v694 = vpack.c.b16 %v648, %v647
      %v695 = vpack.c.b16 %v650, %v649
      %v696 = vpack.c.b16 %v652, %v651
      %v697 = vpack.c.b16 %v654, %v653
      %v698 = vpack.c.b16 %v656, %v655
      %v699 = vpack.c.b16 %v658, %v657
      %v700 = vpack.c.b16 %v660, %v659
      %v701 = vpack.c.b16 %v662, %v661
      %v702 = vpack.c.b16 %v664, %v663
      %v703 = vpack.c.b16 %v666, %v665
      %v704 = vpack.c.b16 %v668, %v667
      %v705 = vpack.c.b16 %v670, %v669
      %v706 = vpack.c.b16 %v672, %v671
      %v707 = vpack.c.b16 %v674, %v673
      %v708 = vpack.c.b16 %v676, %v675
      %v709 = vpack.c.b16 %v678, %v677
      %v710 = vpack.c.b16 %v680, %v679
      %v711 = vpack.c.b16 %v682, %v681
      %v712 = vpack.c.b16 %v684, %v683
      %v713 = vpack.c.b16 %v686, %v685
      %v714 = vpack.c.b16 %v688, %v687
      %v715 = vpack.c.b16 %v690, %v689
      %v716 = vpack.c.b16 %v692, %v691
      %741 = vmatprep.subr.bf16.mxu0 0
      %742 = vmatpush1.bf16.msra.mxu0 %v693
      %743 = vmatprep.subr.bf16.mxu0 0
      %744 = vmatpush1.bf16.msra.mxu0 %v694
      %745 = vmatprep.subr.bf16.mxu0 0
      %746 = vmatpush1.bf16.msra.mxu0 %v695
      %747 = vmatprep.subr.bf16.mxu0 0
      %748 = vmatpush1.bf16.msra.mxu0 %v696
      %749 = vmatprep.subr.bf16.mxu0 0
      %750 = vmatpush1.bf16.msra.mxu0 %v697
      %751 = vmatprep.subr.bf16.mxu0 0
      %752 = vmatpush1.bf16.msra.mxu0 %v698
      %753 = vmatprep.subr.bf16.mxu0 0
      %754 = vmatpush1.bf16.msra.mxu0 %v699
      %755 = vmatprep.subr.bf16.mxu0 0
      %756 = vmatpush1.bf16.msra.mxu0 %v700
      %757 = vmatprep.subr.bf16.mxu0 0
      %758 = vmatpush1.bf16.msra.mxu0 %v701
      %759 = vmatprep.subr.bf16.mxu0 0
      %760 = vmatpush1.bf16.msra.mxu0 %v702
      %761 = vmatprep.subr.bf16.mxu0 0
      %762 = vmatpush1.bf16.msra.mxu0 %v703
      %763 = vmatprep.subr.bf16.mxu0 0
      %764 = vmatpush1.bf16.msra.mxu0 %v704
      %765 = vmatprep.subr.bf16.mxu0 0
      %766 = vmatpush1.bf16.msra.mxu0 %v705
      %767 = vmatprep.subr.bf16.mxu0 0
      %768 = vmatpush1.bf16.msra.mxu0 %v706
      %769 = vmatprep.subr.bf16.mxu0 0
      %770 = vmatpush1.bf16.msra.mxu0 %v707
      %771 = vmatprep.subr.bf16.mxu0 0
      %772 = vmatpush1.bf16.msra.mxu0 %v708
      %773 = vmatprep.mubr.bf16.mxu0 %v192
      %774 = vmatmul.mubr.bf16.gmra.mrb[0].mxu0 %v191
      %v775 = vpop.f32.mrb[0].mxu0
      %v776 = vadd.f32 0.0, %v775
      %v777 = vpop.f32.mrb[0].mxu0
      %v778 = vpop.f32.mrb[0].mxu0
      %v779 = vpop.f32.mrb[0].mxu0
      %780 = vdwg.mxu0
      %781 = vmatprep.subr.bf16.mxu0 0
      %782 = vmatpush1.bf16.msra.mxu0 %v709
      %783 = vmatprep.subr.bf16.mxu0 0
      %784 = vmatpush1.bf16.msra.mxu0 %v710
      %785 = vmatprep.subr.bf16.mxu0 0
      %786 = vmatpush1.bf16.msra.mxu0 %v711
      %787 = vmatprep.subr.bf16.mxu0 0
      %788 = vmatpush1.bf16.msra.mxu0 %v712
      %789 = vmatprep.subr.bf16.mxu0 0
      %790 = vmatpush1.bf16.msra.mxu0 %v713
      %791 = vmatprep.subr.bf16.mxu0 0
      %792 = vmatpush1.bf16.msra.mxu0 %v714
      %793 = vmatprep.subr.bf16.mxu0 0
      %794 = vmatpush1.bf16.msra.mxu0 %v715
      %795 = vmatprep.subr.bf16.mxu0 0
      %796 = vmatpush1.bf16.msra.mxu0 %v716
      %797 = vmatprep.subr.bf16.mxu0 0
      %798 = vmatpush1.bf16.msra.mxu0 0
      %799 = vmatprep.subr.bf16.mxu0 0
      %800 = vmatpush1.bf16.msra.mxu0 0
      %801 = vmatprep.subr.bf16.mxu0 0
      %802 = vmatpush1.bf16.msra.mxu0 0
      %803 = vmatprep.subr.bf16.mxu0 0
      %804 = vmatpush1.bf16.msra.mxu0 0
      %805 = vmatprep.subr.bf16.mxu0 0
      %806 = vmatpush1.bf16.msra.mxu0 0
      %807 = vmatprep.subr.bf16.mxu0 0
      %808 = vmatpush1.bf16.msra.mxu0 0
      %809 = vmatprep.subr.bf16.mxu0 0
      %810 = vmatpush1.bf16.msra.mxu0 0
      %811 = vmatprep.subr.bf16.mxu0 0
      %812 = vmatpush1.bf16.msra.mxu0 0
      %813 = vmatprep.mubr.bf16.mxu0 0
      %814 = vmatmul.mubr.bf16.gmra.mrb[0].mxu0 %v193
      %v815 = vpop.f32.mrb[0].mxu0
      %v816 = vadd.f32 %v776, %v815
      %v817 = vpop.f32.mrb[0].mxu0
      %v818 = vpop.f32.mrb[0].mxu0
      %v819 = vpop.f32.mrb[0].mxu0
      %820 = vdwg.mxu0
      %821 = vmatprep.subr.bf16.mxu0 0
      %822 = vmatpush1.bf16.msra.mxu0 %v693
      %823 = vmatprep.subr.bf16.mxu0 0
      %824 = vmatpush1.bf16.msra.mxu0 %v694
      %825 = vmatprep.subr.bf16.mxu0 0
      %826 = vmatpush1.bf16.msra.mxu0 %v695
      %827 = vmatprep.subr.bf16.mxu0 0
      %828 = vmatpush1.bf16.msra.mxu0 %v696
      %829 = vmatprep.subr.bf16.mxu0 0
      %830 = vmatpush1.bf16.msra.mxu0 %v697
      %831 = vmatprep.subr.bf16.mxu0 0
      %832 = vmatpush1.bf16.msra.mxu0 %v698
      %833 = vmatprep.subr.bf16.mxu0 0
      %834 = vmatpush1.bf16.msra.mxu0 %v699
      %835 = vmatprep.subr.bf16.mxu0 0
      %836 = vmatpush1.bf16.msra.mxu0 %v700
      %837 = vmatprep.subr.bf16.mxu0 0
      %838 = vmatpush1.bf16.msra.mxu0 %v701
      %839 = vmatprep.subr.bf16.mxu0 0
      %840 = vmatpush1.bf16.msra.mxu0 %v702
      %841 = vmatprep.subr.bf16.mxu0 0
      %842 = vmatpush1.bf16.msra.mxu0 %v703
      %843 = vmatprep.subr.bf16.mxu0 0
      %844 = vmatpush1.bf16.msra.mxu0 %v704
      %845 = vmatprep.subr.bf16.mxu0 0
      %846 = vmatpush1.bf16.msra.mxu0 %v705
      %847 = vmatprep.subr.bf16.mxu0 0
      %848 = vmatpush1.bf16.msra.mxu0 %v706
      %849 = vmatprep.subr.bf16.mxu0 0
      %850 = vmatpush1.bf16.msra.mxu0 %v707
      %851 = vmatprep.subr.bf16.mxu0 0
      %852 = vmatpush1.bf16.msra.mxu0 %v708
      %853 = vmatprep.mubr.bf16.mxu0 %v183
      %854 = vmatmul.mubr.bf16.gmra.mrb[0].mxu0 %v182
      %v855 = vpop.f32.mrb[0].mxu0
      %v856 = vadd.f32 %v816, %v855
      %v857 = vpop.f32.mrb[0].mxu0
      %v858 = vpop.f32.mrb[0].mxu0
      %v859 = vpop.f32.mrb[0].mxu0
      %860 = vdwg.mxu0
      %861 = vmatprep.subr.bf16.mxu0 0
      %862 = vmatpush1.bf16.msra.mxu0 %v709
      %863 = vmatprep.subr.bf16.mxu0 0
      %864 = vmatpush1.bf16.msra.mxu0 %v710
      %865 = vmatprep.subr.bf16.mxu0 0
      %866 = vmatpush1.bf16.msra.mxu0 %v711
      %867 = vmatprep.subr.bf16.mxu0 0
      %868 = vmatpush1.bf16.msra.mxu0 %v712
      %869 = vmatprep.subr.bf16.mxu0 0
      %870 = vmatpush1.bf16.msra.mxu0 %v713
      %871 = vmatprep.subr.bf16.mxu0 0
      %872 = vmatpush1.bf16.msra.mxu0 %v714
      %873 = vmatprep.subr.bf16.mxu0 0
      %874 = vmatpush1.bf16.msra.mxu0 %v715
      %875 = vmatprep.subr.bf16.mxu0 0
      %876 = vmatpush1.bf16.msra.mxu0 %v716
      %877 = vmatprep.subr.bf16.mxu0 0
      %878 = vmatpush1.bf16.msra.mxu0 0
      %879 = vmatprep.subr.bf16.mxu0 0
      %880 = vmatpush1.bf16.msra.mxu0 0
      %881 = vmatprep.subr.bf16.mxu0 0
      %882 = vmatpush1.bf16.msra.mxu0 0
      %883 = vmatprep.subr.bf16.mxu0 0
      %884 = vmatpush1.bf16.msra.mxu0 0
      %885 = vmatprep.subr.bf16.mxu0 0
      %886 = vmatpush1.bf16.msra.mxu0 0
      %887 = vmatprep.subr.bf16.mxu0 0
      %888 = vmatpush1.bf16.msra.mxu0 0
      %889 = vmatprep.subr.bf16.mxu0 0
      %890 = vmatpush1.bf16.msra.mxu0 0
      %891 = vmatprep.subr.bf16.mxu0 0
      %892 = vmatpush1.bf16.msra.mxu0 0
      %893 = vmatprep.mubr.bf16.mxu0 0
      %894 = vmatmul.mubr.bf16.gmra.mrb[0].mxu0 %v184
      %v895 = vpop.f32.mrb[0].mxu0
      %v896 = vadd.f32 %v856, %v895
      %v897 = vpop.f32.mrb[0].mxu0
      %v898 = vpop.f32.mrb[0].mxu0
      %v899 = vpop.f32.mrb[0].mxu0
      %900 = vdwg.mxu0
      %v901 = vmul.f32 %v896, 0.017507004
      %v902 = vadd.f32 %v901, -2.0357144
      %s903 = scalar_lea.vmem %s177, 8
      %904 = vst [vmem:[%s903] sm:$0xff] %v902
      %v905 = vld [vmem:[%s1 + $0x8] sm:$0xf]
      %v906 = vld [vmem:[%s1 + $0x14] sm:$0xf]
      %v907 = vld [vmem:[%s1 + $0x20] sm:$0xf]
      %v908 = vld [vmem:[%s1 + $0x2c] sm:$0xf]
      %v909 = vld [vmem:[%s1 + $0x38] sm:$0xf]
      %v910 = vld [vmem:[%s1 + $0x44] sm:$0xf]
      %v911 = vld [vmem:[%s1 + $0x50] sm:$0xf]
      %v912 = vld [vmem:[%s1 + $0x5c] sm:$0xf]
      %v913 = vld [vmem:[%s1 + $0x68] sm:$0xf]
      %v914 = vld [vmem:[%s1 + $0x74] sm:$0xf]
      %v915 = vld [vmem:[%s1 + $0x80] sm:$0xf]
      %v916 = vld [vmem:[%s1 + $0x8c] sm:$0xf]
      %v917 = vld [vmem:[%s1 + $0x98] sm:$0xf]
      %v918 = vld [vmem:[%s1 + $0xa4] sm:$0xf]
      %v919 = vld [vmem:[%s1 + $0xb0] sm:$0xf]
      %v920 = vld [vmem:[%s1 + $0xbc] sm:$0xf]
      %v921 = vld [vmem:[%s1 + $0xc8] sm:$0xf]
      %v922 = vld [vmem:[%s1 + $0xd4] sm:$0xf]
      %v923 = vld [vmem:[%s1 + $0xe0] sm:$0xf]
      %v924 = vld [vmem:[%s1 + $0xec] sm:$0xf]
      %v925 = vld [vmem:[%s1 + $0xf8] sm:$0xf]
      %v926 = vld [vmem:[%s1 + $0x104] sm:$0xf]
      %v927 = vld [vmem:[%s1 + $0x110] sm:$0xf]
      %v928 = vld [vmem:[%s1 + $0x11c] sm:$0xf]
      %v929 = vld [vmem:[%s1 + $0x128] sm:$0xf]
      %v930 = vld [vmem:[%s1 + $0x134] sm:$0xf]
      %v931 = vld [vmem:[%s1 + $0x140] sm:$0xf]
      %v932 = vld [vmem:[%s1 + $0x14c] sm:$0xf]
      %v933 = vld [vmem:[%s1 + $0x158] sm:$0xf]
      %v934 = vld [vmem:[%s1 + $0x164] sm:$0xf]
      %v935 = vld [vmem:[%s1 + $0x170] sm:$0xf]
      %v936 = vld [vmem:[%s1 + $0x17c] sm:$0xf]
      %v937 = vld [vmem:[%s1 + $0x188] sm:$0xf]
      %v938 = vld [vmem:[%s1 + $0x194] sm:$0xf]
      %v939 = vld [vmem:[%s1 + $0x1a0] sm:$0xf]
      %v940 = vld [vmem:[%s1 + $0x1ac] sm:$0xf]
      %v941 = vld [vmem:[%s1 + $0x1b8] sm:$0xf]
      %v942 = vld [vmem:[%s1 + $0x1c4] sm:$0xf]
      %v943 = vld [vmem:[%s1 + $0x1d0] sm:$0xf]
      %v944 = vld [vmem:[%s1 + $0x1dc] sm:$0xf]
      %v945 = vld [vmem:[%s1 + $0x1e8] sm:$0xf]
      %v946 = vld [vmem:[%s1 + $0x1f4] sm:$0xf]
      %v947 = vld [vmem:[%s1 + $0x200] sm:$0xf]
      %v948 = vld [vmem:[%s1 + $0x20c] sm:$0xf]
      %v949 = vld [vmem:[%s1 + $0x218] sm:$0xf]
      %v950 = vld [vmem:[%s1 + $0x224] sm:$0xf]
      %v951 = vld [vmem:[%s1 + $0x230] sm:$0xf]
      %v952 = vld [vmem:[%s1 + $0x23c] sm:$0xf]
      %v1001 = vunpack.c.l.b16 %v905
      %v1002 = vunpack.c.l.b16 %v906
      %v1003 = vunpack.c.l.b16 %v907
      %v1004 = vunpack.c.l.b16 %v908
      %v1005 = vunpack.c.l.b16 %v909
      %v1006 = vunpack.c.l.b16 %v910
      %v1007 = vunpack.c.l.b16 %v911
      %v1008 = vunpack.c.l.b16 %v912
      %v1009 = vunpack.c.l.b16 %v913
      %v1010 = vunpack.c.l.b16 %v914
      %v1011 = vunpack.c.l.b16 %v915
      %v1012 = vunpack.c.l.b16 %v916
      %v1013 = vunpack.c.l.b16 %v917
      %v1014 = vunpack.c.l.b16 %v918
      %v1015 = vunpack.c.l.b16 %v919
      %v1016 = vunpack.c.l.b16 %v920
      %v1017 = vunpack.c.l.b16 %v921
      %v1018 = vunpack.c.l.b16 %v922
      %v1019 = vunpack.c.l.b16 %v923
      %v1020 = vunpack.c.l.b16 %v924
      %v1021 = vunpack.c.l.b16 %v925
      %v1022 = vunpack.c.l.b16 %v926
      %v1023 = vunpack.c.l.b16 %v927
      %v1024 = vunpack.c.l.b16 %v928
      %v1025 = vunpack.c.l.b16 %v929
      %v1026 = vunpack.c.l.b16 %v930
      %v1027 = vunpack.c.l.b16 %v931
      %v1028 = vunpack.c.l.b16 %v932
      %v1029 = vunpack.c.l.b16 %v933
      %v1030 = vunpack.c.l.b16 %v934
      %v1031 = vunpack.c.l.b16 %v935
      %v1032 = vunpack.c.l.b16 %v936
      %v1033 = vunpack.c.l.b16 %v937
      %v1034 = vunpack.c.l.b16 %v938
      %v1035 = vunpack.c.l.b16 %v939
      %v1036 = vunpack.c.l.b16 %v940
      %v1037 = vunpack.c.l.b16 %v941
      %v1038 = vunpack.c.l.b16 %v942
      %v1039 = vunpack.c.l.b16 %v943
      %v1040 = vunpack.c.l.b16 %v944
      %v1041 = vunpack.c.l.b16 %v945
      %v1042 = vunpack.c.l.b16 %v946
      %v1043 = vunpack.c.l.b16 %v947
      %v1044 = vunpack.c.l.b16 %v948
      %v1045 = vunpack.c.l.b16 %v949
      %v1046 = vunpack.c.l.b16 %v950
      %v1047 = vunpack.c.l.b16 %v951
      %v1048 = vunpack.c.l.b16 %v952
      %v1049 = vpack.c.b16 %v1002, %v1001
      %v1050 = vpack.c.b16 %v1004, %v1003
      %v1051 = vpack.c.b16 %v1006, %v1005
      %v1052 = vpack.c.b16 %v1008, %v1007
      %v1053 = vpack.c.b16 %v1010, %v1009
      %v1054 = vpack.c.b16 %v1012, %v1011
      %v1055 = vpack.c.b16 %v1014, %v1013
      %v1056 = vpack.c.b16 %v1016, %v1015
      %v1057 = vpack.c.b16 %v1018, %v1017
      %v1058 = vpack.c.b16 %v1020, %v1019
      %v1059 = vpack.c.b16 %v1022, %v1021
      %v1060 = vpack.c.b16 %v1024, %v1023
      %v1061 = vpack.c.b16 %v1026, %v1025
      %v1062 = vpack.c.b16 %v1028, %v1027
      %v1063 = vpack.c.b16 %v1030, %v1029
      %v1064 = vpack.c.b16 %v1032, %v1031
      %v1065 = vpack.c.b16 %v1034, %v1033
      %v1066 = vpack.c.b16 %v1036, %v1035
      %v1067 = vpack.c.b16 %v1038, %v1037
      %v1068 = vpack.c.b16 %v1040, %v1039
      %v1069 = vpack.c.b16 %v1042, %v1041
      %v1070 = vpack.c.b16 %v1044, %v1043
      %v1071 = vpack.c.b16 %v1046, %v1045
      %v1072 = vpack.c.b16 %v1048, %v1047
      %1097 = vmatprep.subr.bf16.mxu0 0
      %1098 = vmatpush1.bf16.msra.mxu0 %v1049
      %1099 = vmatprep.subr.bf16.mxu0 0
      %1100 = vmatpush1.bf16.msra.mxu0 %v1050
      %1101 = vmatprep.subr.bf16.mxu0 0
      %1102 = vmatpush1.bf16.msra.mxu0 %v1051
      %1103 = vmatprep.subr.bf16.mxu0 0
      %1104 = vmatpush1.bf16.msra.mxu0 %v1052
      %1105 = vmatprep.subr.bf16.mxu0 0
      %1106 = vmatpush1.bf16.msra.mxu0 %v1053
      %1107 = vmatprep.subr.bf16.mxu0 0
      %1108 = vmatpush1.bf16.msra.mxu0 %v1054
      %1109 = vmatprep.subr.bf16.mxu0 0
      %1110 = vmatpush1.bf16.msra.mxu0 %v1055
      %1111 = vmatprep.subr.bf16.mxu0 0
      %1112 = vmatpush1.bf16.msra.mxu0 %v1056
      %1113 = vmatprep.subr.bf16.mxu0 0
      %1114 = vmatpush1.bf16.msra.mxu0 %v1057
      %1115 = vmatprep.subr.bf16.mxu0 0
      %1116 = vmatpush1.bf16.msra.mxu0 %v1058
      %1117 = vmatprep.subr.bf16.mxu0 0
      %1118 = vmatpush1.bf16.msra.mxu0 %v1059
      %1119 = vmatprep.subr.bf16.mxu0 0
      %1120 = vmatpush1.bf16.msra.mxu0 %v1060
      %1121 = vmatprep.subr.bf16.mxu0 0
      %1122 = vmatpush1.bf16.msra.mxu0 %v1061
      %1123 = vmatprep.subr.bf16.mxu0 0
      %1124 = vmatpush1.bf16.msra.mxu0 %v1062
      %1125 = vmatprep.subr.bf16.mxu0 0
      %1126 = vmatpush1.bf16.msra.mxu0 %v1063
      %1127 = vmatprep.subr.bf16.mxu0 0
      %1128 = vmatpush1.bf16.msra.mxu0 %v1064
      %1129 = vmatprep.mubr.bf16.mxu0 %v192
      %1130 = vmatmul.mubr.bf16.gmra.mrb[0].mxu0 %v191
      %v1131 = vpop.f32.mrb[0].mxu0
      %v1132 = vadd.f32 0.0, %v1131
      %v1133 = vpop.f32.mrb[0].mxu0
      %v1134 = vpop.f32.mrb[0].mxu0
      %v1135 = vpop.f32.mrb[0].mxu0
      %1136 = vdwg.mxu0
      %1137 = vmatprep.subr.bf16.mxu0 0
      %1138 = vmatpush1.bf16.msra.mxu0 %v1065
      %1139 = vmatprep.subr.bf16.mxu0 0
      %1140 = vmatpush1.bf16.msra.mxu0 %v1066
      %1141 = vmatprep.subr.bf16.mxu0 0
      %1142 = vmatpush1.bf16.msra.mxu0 %v1067
      %1143 = vmatprep.subr.bf16.mxu0 0
      %1144 = vmatpush1.bf16.msra.mxu0 %v1068
      %1145 = vmatprep.subr.bf16.mxu0 0
      %1146 = vmatpush1.bf16.msra.mxu0 %v1069
      %1147 = vmatprep.subr.bf16.mxu0 0
      %1148 = vmatpush1.bf16.msra.mxu0 %v1070
      %1149 = vmatprep.subr.bf16.mxu0 0
      %1150 = vmatpush1.bf16.msra.mxu0 %v1071
      %1151 = vmatprep.subr.bf16.mxu0 0
      %1152 = vmatpush1.bf16.msra.mxu0 %v1072
      %1153 = vmatprep.subr.bf16.mxu0 0
      %1154 = vmatpush1.bf16.msra.mxu0 0
      %1155 = vmatprep.subr.bf16.mxu0 0
      %1156 = vmatpush1.bf16.msra.mxu0 0
      %1157 = vmatprep.subr.bf16.mxu0 0
      %1158 = vmatpush1.bf16.msra.mxu0 0
      %1159 = vmatprep.subr.bf16.mxu0 0
      %1160 = vmatpush1.bf16.msra.mxu0 0
      %1161 = vmatprep.subr.bf16.mxu0 0
      %1162 = vmatpush1.bf16.msra.mxu0 0
      %1163 = vmatprep.subr.bf16.mxu0 0
      %1164 = vmatpush1.bf16.msra.mxu0 0
      %1165 = vmatprep.subr.bf16.mxu0 0
      %1166 = vmatpush1.bf16.msra.mxu0 0
      %1167 = vmatprep.subr.bf16.mxu0 0
      %1168 = vmatpush1.bf16.msra.mxu0 0
      %1169 = vmatprep.mubr.bf16.mxu0 0
      %1170 = vmatmul.mubr.bf16.gmra.mrb[0].mxu0 %v193
      %v1171 = vpop.f32.mrb[0].mxu0
      %v1172 = vadd.f32 %v1132, %v1171
      %v1173 = vpop.f32.mrb[0].mxu0
      %v1174 = vpop.f32.mrb[0].mxu0
      %v1175 = vpop.f32.mrb[0].mxu0
      %1176 = vdwg.mxu0
      %1177 = vmatprep.subr.bf16.mxu0 0
      %1178 = vmatpush1.bf16.msra.mxu0 %v1049
      %1179 = vmatprep.subr.bf16.mxu0 0
      %1180 = vmatpush1.bf16.msra.mxu0 %v1050
      %1181 = vmatprep.subr.bf16.mxu0 0
      %1182 = vmatpush1.bf16.msra.mxu0 %v1051
      %1183 = vmatprep.subr.bf16.mxu0 0
      %1184 = vmatpush1.bf16.msra.mxu0 %v1052
      %1185 = vmatprep.subr.bf16.mxu0 0
      %1186 = vmatpush1.bf16.msra.mxu0 %v1053
      %1187 = vmatprep.subr.bf16.mxu0 0
      %1188 = vmatpush1.bf16.msra.mxu0 %v1054
      %1189 = vmatprep.subr.bf16.mxu0 0
      %1190 = vmatpush1.bf16.msra.mxu0 %v1055
      %1191 = vmatprep.subr.bf16.mxu0 0
      %1192 = vmatpush1.bf16.msra.mxu0 %v1056
      %1193 = vmatprep.subr.bf16.mxu0 0
      %1194 = vmatpush1.bf16.msra.mxu0 %v1057
      %1195 = vmatprep.subr.bf16.mxu0 0
      %1196 = vmatpush1.bf16.msra.mxu0 %v1058
      %1197 = vmatprep.subr.bf16.mxu0 0
      %1198 = vmatpush1.bf16.msra.mxu0 %v1059
      %1199 = vmatprep.subr.bf16.mxu0 0
      %1200 = vmatpush1.bf16.msra.mxu0 %v1060
      %1201 = vmatprep.subr.bf16.mxu0 0
      %1202 = vmatpush1.bf16.msra.mxu0 %v1061
      %1203 = vmatprep.subr.bf16.mxu0 0
      %1204 = vmatpush1.bf16.msra.mxu0 %v1062
      %1205 = vmatprep.subr.bf16.mxu0 0
      %1206 = vmatpush1.bf16.msra.mxu0 %v1063
      %1207 = vmatprep.subr.bf16.mxu0 0
      %1208 = vmatpush1.bf16.msra.mxu0 %v1064
      %1209 = vmatprep.mubr.bf16.mxu0 %v183
      %1210 = vmatmul.mubr.bf16.gmra.mrb[0].mxu0 %v182
      %v1211 = vpop.f32.mrb[0].mxu0
      %v1212 = vadd.f32 %v1172, %v1211
      %v1213 = vpop.f32.mrb[0].mxu0
      %v1214 = vpop.f32.mrb[0].mxu0
      %v1215 = vpop.f32.mrb[0].mxu0
      %1216 = vdwg.mxu0
      %1217 = vmatprep.subr.bf16.mxu0 0
      %1218 = vmatpush1.bf16.msra.mxu0 %v1065
      %1219 = vmatprep.subr.bf16.mxu0 0
      %1220 = vmatpush1.bf16.msra.mxu0 %v1066
      %1221 = vmatprep.subr.bf16.mxu0 0
      %1222 = vmatpush1.bf16.msra.mxu0 %v1067
      %1223 = vmatprep.subr.bf16.mxu0 0
      %1224 = vmatpush1.bf16.msra.mxu0 %v1068
      %1225 = vmatprep.subr.bf16.mxu0 0
      %1226 = vmatpush1.bf16.msra.mxu0 %v1069
      %1227 = vmatprep.subr.bf16.mxu0 0
      %1228 = vmatpush1.bf16.msra.mxu0 %v1070
      %1229 = vmatprep.subr.bf16.mxu0 0
      %1230 = vmatpush1.bf16.msra.mxu0 %v1071
      %1231 = vmatprep.subr.bf16.mxu0 0
      %1232 = vmatpush1.bf16.msra.mxu0 %v1072
      %1233 = vmatprep.subr.bf16.mxu0 0
      %1234 = vmatpush1.bf16.msra.mxu0 0
      %1235 = vmatprep.subr.bf16.mxu0 0
      %1236 = vmatpush1.bf16.msra.mxu0 0
      %1237 = vmatprep.subr.bf16.mxu0 0
      %1238 = vmatpush1.bf16.msra.mxu0 0
      %1239 = vmatprep.subr.bf16.mxu0 0
      %1240 = vmatpush1.bf16.msra.mxu0 0
      %1241 = vmatprep.subr.bf16.mxu0 0
      %1242 = vmatpush1.bf16.msra.mxu0 0
      %1243 = vmatprep.subr.bf16.mxu0 0
      %1244 = vmatpush1.bf16.msra.mxu0 0
      %1245 = vmatprep.subr.bf16.mxu0 0
      %1246 = vmatpush1.bf16.msra.mxu0 0
      %1247 = vmatprep.subr.bf16.mxu0 0
      %1248 = vmatpush1.bf16.msra.mxu0 0
      %1249 = vmatprep.mubr.bf16.mxu0 0
      %1250 = vmatmul.mubr.bf16.gmra.mrb[0].mxu0 %v184
      %v1251 = vpop.f32.mrb[0].mxu0
      %v1252 = vadd.f32 %v1212, %v1251
      %v1253 = vpop.f32.mrb[0].mxu0
      %v1254 = vpop.f32.mrb[0].mxu0
      %v1255 = vpop.f32.mrb[0].mxu0
      %1256 = vdwg.mxu0
      %v1257 = vmul.f32 %v1252, 0.017429193
      %v1258 = vadd.f32 %v1257, -1.8044444
      %s1259 = scalar_lea.vmem %s177, 16
      %1260 = vst [vmem:[%s1259] sm:$0xff] %v1258
      %p1261 = scmp.lt.s32.totalorder %s17, 1
      %s1262 = scalar_select %p1261, %s17, 1
      %p1263 = scmp.lt.s32.totalorder %s18, 0
      %s1264 = scalar_select %p1263, %s18, 0
      %s1265 = smul.addr %s1262, 3
      %s1266 = sadd.s32 %s1264, %s1265
      %s1267 = smul.addr %s1266, 8
      %s1268 = scalar_lea.vmem %s2, %s1267
      // Predicated region
      $region29: #{_lambda_.1} parent=27 // pred_check
        %p1269 = pneg %p94
      $region30: #{_lambda_.1} parent=27 // pred_check_branch
        %1271 = sbr.rel (%p1269) target = $region32
      $region31: #{_lambda_.1} parent=27 // pred_region
        _
      $region32: #{_lambda_.1} parent=27 // pred_fallthru
        _
    $region28: #{_lambda_.1} parent=5 // pred_fallthru
      _
    %p1272 = scmp.le.s32.totalorder 2, %s8
    // Predicated region
    $region33: #{_lambda_.1} parent=5 // pred_check
      %p1273 = pneg %p1272
    $region34: #{_lambda_.1} parent=5 // pred_check_branch
      %1275 = sbr.rel (%p1273) target = $region36
    $region35: #{_lambda_.1} parent=5 // pred_region
      %s1276 = ssub.s32 %s8, 2
      // Predicated region
      $region37: #{_lambda_.1} parent=35 // pred_check
        %p1277 = pneg %p100
      $region38: #{_lambda_.1} parent=35 // pred_check_branch
        %1279 = sbr.rel (%p1277) target = $region40
      $region39: #{_lambda_.1} parent=35 // pred_region
        %p1280 = scmp.lt.s32.totalorder %s19, 1
        %s1281 = scalar_select %p1280, %s19, 1
        %p1282 = scmp.lt.s32.totalorder %s20, 0
        %s1283 = scalar_select %p1282, %s20, 0
        %s1284 = smul.addr %s1281, 3
        %s1285 = sadd.s32 %s1283, %s1284
        %s1286 = smul.addr %s1285, 8
        %s1287 = scalar_lea.vmem %s2, %s1286
      $region40: #{_lambda_.1} parent=35 // pred_fallthru
        _
    $region36: #{_lambda_.1} parent=5 // pred_fallthru
      _
  $region6: #{_lambda_.1} parent=0 // loop_footer
    %s12 = sadd.s32 1, %s8
  $region7: #{_lambda_.1} parent=0 // loop_footer_branch
    %7 = sbr.rel target = $region3
  $region8: #{_lambda_.1} parent=0 // loop_exit
    _

</llo_original>
